<compile_context>
chip_gen: v5e
topology: v5e:2x2
jax: 0.10.0
libtpu: 0.0.40
codegen_flags: <defaults>
</compile_context>

<pallas_src>
import functools

import jax
import jax.numpy as jnp
import numpy as np
from jax.experimental import pallas as pl
from jax.experimental.pallas import tpu as pltpu


def _round_up(x: int, m: int) -> int:
    return (x + m - 1) // m * m


@functools.lru_cache(maxsize=None)
def _vmem_capacity_bytes() -> int:
    try:
        return int(pltpu.get_tpu_info().vmem_capacity_bytes)
    except Exception:                      # query unavailable -> conservative default
        return 128 << 20


def _choose_tiles(rows, d_model_p, d_ff_p, xb, wb, align, tile_m, tile_ff, tile_n):
    vmem_cap = _vmem_capacity_bytes()
    small_vmem = vmem_cap <= (64 << 20)    # v7x-class (64 MiB per TensorCore)
    budget = int(0.85 * vmem_cap) if small_vmem else min(int(0.80 * vmem_cap), 100 << 20)

    if tile_m is None:
        tile_m = 512 if small_vmem else 1024
    # Keep >= 2 row tiles so the 'parallel' row axis feeds both v7x TensorCores.
    if rows >= 2 * align:
        tile_m = min(tile_m, _round_up(-(-rows // 2), align))
    else:
        tile_m = min(tile_m, _round_up(rows, align))

    tile_ff = min(tile_ff, d_ff_p)
    if tile_n is None:
        tile_n = d_model_p
    tile_n = min(tile_n, d_model_p)

    def footprint(tm, tf, tn):
        return (2 * tm * d_model_p * xb        # x tile (double-buffered)
                + 2 * d_model_p * tf * wb      # W1 slice (double-buffered)
                + 2 * tf * tn * wb             # W2 slice (double-buffered)
                + 2 * tn * 4                   # folded bias slice (f32)
                + 2 * tm * tn * xb             # out tile (double-buffered)
                + tm * tn * 4                  # f32 accumulator scratch
                + tm * tf * 4 + tm * tf * wb   # h (f32) + its cast copy
                + (2 << 20))                   # Mosaic internal scratch slack

    # Greedy shrink: output columns first, then the d_ff slice, then the row tile.
    while footprint(tile_m, tile_ff, tile_n) > budget:
        if tile_n > 512:
            tile_n = max(512, _round_up(tile_n // 2, 128))
        elif tile_ff > 256:
            tile_ff = max(256, _round_up(tile_ff // 2, 128))
        elif tile_m > max(256, align):
            tile_m = max(align, _round_up(tile_m // 2, align))
        else:
            break

    vmem_limit = int(min(max(budget, footprint(tile_m, tile_ff, tile_n) + (4 << 20)),
                         vmem_cap))
    return tile_m, tile_ff, tile_n, vmem_limit


def _ffn_kernel(x_ref, w1_ref, w2_ref, b2_ref, o_ref, acc_ref):
    # x_ref : (TM, DM)    row tile, resident across the d_ff reduction axis
    # w1_ref: (DM, TFF)   slice of W1 (stored (in, out)) along d_ff
    # w2_ref: (TFF, TN)   slice of W2 along d_ff and output columns
    # b2_ref: (1, TN)     folded bias (b1 @ W2 + b2), f32
    # o_ref : (TM, TN)
    # acc_ref: (TM, TN)   f32 accumulator scratch
    k = pl.program_id(2)

    @pl.when(k == 0)
    def _init():
        acc_ref[...] = jnp.zeros_like(acc_ref)

    # First GEMM on this d_ff slice (b1 folded into b2_ref by the wrapper;
    # dropout is identity in eval mode).
    h = jnp.dot(x_ref[...], w1_ref[...], preferred_element_type=jnp.float32)
    # Second GEMM, accumulated over d_ff slices.
    acc_ref[...] += jnp.dot(h.astype(w2_ref.dtype), w2_ref[...],
                            preferred_element_type=jnp.float32)

    @pl.when(k == pl.num_programs(2) - 1)
    def _finalize():
        o_ref[...] = (acc_ref[...] + b2_ref[...]).astype(o_ref.dtype)


@functools.partial(jax.jit, static_argnames=("tile_m", "tile_ff", "tile_n"))
def feed_forward_block(x, w1_t, b1, w2_t, b2, *, tile_m=None, tile_ff=512, tile_n=None):
    """x: (B, S, d_model) -> (B, S, d_model).

    Weights are stored as (in, out), i.e. transposed vs. PyTorch nn.Linear's
    (out, in) `.weight`.  For best performance pass 128-aligned bf16 weights
    (unaligned weights are re-padded inside this call).
    """
    assert x.ndim == 3
    B, S, d_model = x.shape
    d_ff = w1_t.shape[1]
    assert w1_t.shape == (d_model, d_ff)
    assert w2_t.shape == (d_ff, d_model)
    rows = B * S

    xb = jnp.dtype(x.dtype).itemsize
    wb = jnp.dtype(w1_t.dtype).itemsize
    align = 16 if xb < 4 else 8            # bf16 packs two rows per sublane

    d_model_p = _round_up(d_model, 128)    # lane-dense K of the first GEMM
    d_ff_p = _round_up(d_ff, 128)

    tile_m, tile_ff, tile_n, vmem_limit = _choose_tiles(
        rows, d_model_p, d_ff_p, xb, wb, align, tile_m, tile_ff, tile_n)

    rows_p = _round_up(rows, tile_m)
    d_ff_pp = _round_up(d_ff_p, tile_ff)
    n_p = _round_up(d_model_p, tile_n)     # padded output-column extent

    # Fold the first-layer bias into the second (exact, since dropout is identity):
    #   (x @ W1 + b1) @ W2 + b2  ==  x @ W1 @ W2 + (b1 @ W2 + b2)
    # Computed in f32 so b1's contribution is never quantized through a bf16 h.
    b2_eff = (b1.astype(jnp.float32) @ w2_t.astype(jnp.float32)
              + b2.astype(jnp.float32))

    def pad2(a, r, c):
        if a.shape == (r, c):              # skip no-op pads (no weight copies)
            return a
        return jnp.pad(a, ((0, r - a.shape[0]), (0, c - a.shape[1])))

    x2d = pad2(x.reshape(rows, d_model), rows_p, d_model_p)
    w1_p = pad2(w1_t, d_model_p, d_ff_pp)
    w2_p = pad2(w2_t, d_ff_pp, n_p)
    b2_p = pad2(b2_eff.reshape(1, d_model), 1, n_p)

    row_tiles = rows_p // tile_m
    n_tiles = n_p // tile_n
    k_tiles = d_ff_pp // tile_ff
    grid = (row_tiles, n_tiles, k_tiles)

    cost = pl.CostEstimate(
        flops=(2 * rows_p * d_model_p * d_ff_pp * n_tiles   # 1st GEMM (redone per N tile)
               + 2 * rows_p * d_ff_pp * n_p),               # 2nd GEMM
        transcendentals=0,
        bytes_accessed=(rows_p * d_model_p * xb                           # x (once per row tile)
                        + row_tiles * n_tiles * d_model_p * d_ff_pp * wb  # W1 re-streamed
                        + row_tiles * d_ff_pp * n_p * wb                  # W2 re-streamed
                        + row_tiles * n_p * 4                             # folded bias
                        + rows_p * n_p * xb),                             # output write
    )

    out2d = pl.pallas_call(
        _ffn_kernel,
        out_shape=jax.ShapeDtypeStruct((rows_p, n_p), x.dtype),
        grid_spec=pltpu.PrefetchScalarGridSpec(
            num_scalar_prefetch=0,
            grid=grid,
            in_specs=[
                pl.BlockSpec((tile_m, d_model_p), lambda i, j, k: (i, 0)),   # x rows
                pl.BlockSpec((d_model_p, tile_ff), lambda i, j, k: (0, k)),  # W1 slice
                # TODO(synk): try pipeline_mode=pl.Buffered(3) on the weight
                # slices on 128-MiB-VMEM chips (v6e) once footprint has
                # headroom; keep 2-deep on v7x.
                pl.BlockSpec((tile_ff, tile_n), lambda i, j, k: (k, j)),     # W2 slice
                pl.BlockSpec((1, tile_n), lambda i, j, k: (0, j)),           # folded bias
            ],
            out_specs=pl.BlockSpec((tile_m, tile_n), lambda i, j, k: (i, j)),
            scratch_shapes=[pltpu.VMEM((tile_m, tile_n), jnp.float32)],
        ),
        compiler_params=pltpu.CompilerParams(
            dimension_semantics=("parallel", "parallel", "arbitrary"),
            vmem_limit_bytes=vmem_limit,
        ),
        cost_estimate=cost,
    )(x2d, w1_p, w2_p, b2_p)

    return out2d[:rows, :d_model].reshape(B, S, d_model)


def _init_linear(key, in_features, out_features, dtype=jnp.float32):
    """PyTorch nn.Linear init: U(-1/sqrt(in), 1/sqrt(in)); weight stored (in, out)."""
    kw, kb = jax.random.split(key)
    bound = 1.0 / (in_features ** 0.5)
    w_t = jax.random.uniform(kw, (in_features, out_features), dtype,
                             minval=-bound, maxval=bound)
    b = jax.random.uniform(kb, (out_features,), dtype,
                           minval=-bound, maxval=bound)
    return w_t, b


if __name__ == "__main__":
    # Small shapes consistent with the module's forward (x is 3-D, last dim = d_model).
    B, S, d_model, d_ff = 2, 8, 32, 64

    key = jax.random.PRNGKey(0)
    kx, k1, k2 = jax.random.split(key, 3)

    x = jax.random.normal(kx, (B, S, d_model), jnp.float32)
    w1_t, b1 = _init_linear(k1, d_model, d_ff)
    w2_t, b2 = _init_linear(k2, d_ff, d_model)

    out = feed_forward_block(x, w1_t, b1, w2_t, b2)
    out = jax.block_until_ready(out)

    # Reference (dropout is identity in eval mode), computed in float64 on host.
    xn = np.asarray(x, np.float64).reshape(-1, d_model)
    ref = (xn @ np.asarray(w1_t, np.float64) + np.asarray(b1, np.float64)) \
        @ np.asarray(w2_t, np.float64) + np.asarray(b2, np.float64)
    ref = ref.reshape(B, S, d_model)

    assert out.shape == (B, S, d_model)
    err = float(np.max(np.abs(np.asarray(out, np.float64) - ref)))
    assert err < 2e-2, f"max abs error {err}"

    print("KERNEL_OK")
</pallas_src>

<mosaic_0001>
module attributes {stable_mosaic.version = 11 : i64} {
  func.func @_ffn_kernel(%arg0: i32, %arg1: i32, %arg2: i32, %arg3: memref<8x128xf32, #tpu.memory_space<vmem>>, %arg4: memref<128x128xf32, #tpu.memory_space<vmem>>, %arg5: memref<128x128xf32, #tpu.memory_space<vmem>>, %arg6: memref<1x128xf32, #tpu.memory_space<vmem>>, %arg7: memref<8x128xf32, #tpu.memory_space<vmem>>, %arg8: memref<8x128xf32, #tpu.memory_space<vmem>>) attributes {dimension_semantics = [#tpu.dimension_semantics<parallel>, #tpu.dimension_semantics<parallel>, #tpu.dimension_semantics<arbitrary>], iteration_bounds = array<i64: 2, 1, 1>, scalar_prefetch = 0 : i64, scratch_operands = 1 : i64, tpu.core_type = #tpu.core_type<tc>, window_params = [{transform_indices = @transform_0, window_bounds = array<i64: 8, 128>}, {transform_indices = @transform_1, window_bounds = array<i64: 128, 128>}, {transform_indices = @transform_2, window_bounds = array<i64: 128, 128>}, {transform_indices = @transform_3, window_bounds = array<i64: 1, 128>}, {transform_indices = @transform_4, window_bounds = array<i64: 8, 128>}]} {
    %c0_i32 = arith.constant 0 : i32
    %0 = arith.cmpi eq, %arg2, %c0_i32 : i32
    %1 = arith.extui %0 : i1 to i32
    %c0_i32_0 = arith.constant 0 : i32
    %2 = arith.cmpi ne, %1, %c0_i32_0 : i32
    scf.if %2 {
      %cst_13 = arith.constant 0.000000e+00 : f32
      %14 = vector.broadcast %cst_13 : f32 to vector<8x128xf32>
      %c0_14 = arith.constant 0 : index
      %c0_15 = arith.constant 0 : index
      %15 = vector.load %arg8[%c0_14, %c0_15] : memref<8x128xf32, #tpu.memory_space<vmem>>, vector<8x128xf32>
      tpu.vector_store %arg8[%c0_14, %c0_15], %14 {strides = array<i32>} : memref<8x128xf32, #tpu.memory_space<vmem>>, vector<8x128xf32>,
    } else {
    }
    %c0 = arith.constant 0 : index
    %c0_1 = arith.constant 0 : index
    %3 = vector.load %arg3[%c0, %c0_1] : memref<8x128xf32, #tpu.memory_space<vmem>>, vector<8x128xf32>
    %c0_2 = arith.constant 0 : index
    %c0_3 = arith.constant 0 : index
    %4 = vector.load %arg4[%c0_2, %c0_3] : memref<128x128xf32, #tpu.memory_space<vmem>>, vector<128x128xf32>
    %cst = arith.constant dense<0.000000e+00> : vector<8x128xf32>
    %5 = tpu.matmul %3, %4, %cst {dimension_numbers = #tpu.dot_dimension_numbers<[1], [0], [0], [1], [0, 0, 1, 1], [], []>} : vector<8x128xf32>, vector<128x128xf32>, vector<8x128xf32> -> vector<8x128xf32>
    %c0_4 = arith.constant 0 : index
    %c0_5 = arith.constant 0 : index
    %6 = vector.load %arg8[%c0_4, %c0_5] : memref<8x128xf32, #tpu.memory_space<vmem>>, vector<8x128xf32>
    %c0_6 = arith.constant 0 : index
    %c0_7 = arith.constant 0 : index
    %7 = vector.load %arg5[%c0_6, %c0_7] : memref<128x128xf32, #tpu.memory_space<vmem>>, vector<128x128xf32>
    %cst_8 = arith.constant dense<0.000000e+00> : vector<8x128xf32>
    %8 = tpu.matmul %5, %7, %cst_8 {dimension_numbers = #tpu.dot_dimension_numbers<[1], [0], [0], [1], [0, 0, 1, 1], [], []>} : vector<8x128xf32>, vector<128x128xf32>, vector<8x128xf32> -> vector<8x128xf32>
    %9 = arith.addf %6, %8 : vector<8x128xf32>
    %c0_9 = arith.constant 0 : index
    %c0_10 = arith.constant 0 : index
    %10 = vector.load %arg8[%c0_9, %c0_10] : memref<8x128xf32, #tpu.memory_space<vmem>>, vector<8x128xf32>
    tpu.vector_store %arg8[%c0_9, %c0_10], %9 {strides = array<i32>} : memref<8x128xf32, #tpu.memory_space<vmem>>, vector<8x128xf32>,
    %c0_i32_11 = arith.constant 0 : i32
    %11 = arith.cmpi eq, %arg2, %c0_i32_11 : i32
    %12 = arith.extui %11 : i1 to i32
    %c0_i32_12 = arith.constant 0 : i32
    %13 = arith.cmpi ne, %12, %c0_i32_12 : i32
    scf.if %13 {
      %c0_13 = arith.constant 0 : index
      %c0_14 = arith.constant 0 : index
      %14 = vector.load %arg8[%c0_13, %c0_14] : memref<8x128xf32, #tpu.memory_space<vmem>>, vector<8x128xf32>
      %c0_15 = arith.constant 0 : index
      %c0_16 = arith.constant 0 : index
      %15 = vector.load %arg6[%c0_15, %c0_16] : memref<1x128xf32, #tpu.memory_space<vmem>>, vector<1x128xf32>
      %16 = vector.broadcast %15 : vector<1x128xf32> to vector<8x128xf32>
      %17 = arith.addf %14, %16 : vector<8x128xf32>
      %c0_17 = arith.constant 0 : index
      %c0_18 = arith.constant 0 : index
      %18 = vector.load %arg7[%c0_17, %c0_18] : memref<8x128xf32, #tpu.memory_space<vmem>>, vector<8x128xf32>
      tpu.vector_store %arg7[%c0_17, %c0_18], %17 {strides = array<i32>} : memref<8x128xf32, #tpu.memory_space<vmem>>, vector<8x128xf32>,
    } else {
    }
    return
  }
  func.func @transform_0(%arg0: i32, %arg1: i32, %arg2: i32) -> (i32, i32) {
    %c0_i32 = arith.constant 0 : i32
    %c0_i32_0 = arith.constant 0 : i32
    return %arg0, %c0_i32 : i32, i32
  }
  func.func @transform_1(%arg0: i32, %arg1: i32, %arg2: i32) -> (i32, i32) {
    %c0_i32 = arith.constant 0 : i32
    %c0_i32_0 = arith.constant 0 : i32
    return %c0_i32, %arg2 : i32, i32
  }
  func.func @transform_2(%arg0: i32, %arg1: i32, %arg2: i32) -> (i32, i32) {
    %c0_i32 = arith.constant 0 : i32
    return %arg2, %arg1 : i32, i32
  }
  func.func @transform_3(%arg0: i32, %arg1: i32, %arg2: i32) -> (i32, i32) {
    %c0_i32 = arith.constant 0 : i32
    %c0_i32_0 = arith.constant 0 : i32
    return %c0_i32, %arg1 : i32, i32
  }
  func.func @transform_4(%arg0: i32, %arg1: i32, %arg2: i32) -> (i32, i32) {
    %c0_i32 = arith.constant 0 : i32
    return %arg0, %arg1 : i32, i32
  }
}

</mosaic_0001>

<llo_original>
// kernel: feed_forward_block.1
$region0: #{feed_forward_block.1}
  #allocation0 [shape = 'u32[]', space=smem, size = 0x4, offset = 0x4, fixed_abs, tag = 'smem constant byte address 0x4 - core index']
  #allocation1 [shape = 'u32[72,128]{1,0:T(1,128)}', space=vmem, size = 0x9000, scoped, tag = 'internal scratch']
  #allocation2 [shape = 'f32[8,128]{1,0:T(8,128)}', space=vmem, size = 0x1000, scoped, tag = 'scratch operand']
  %s0 = inlined_call_operand.vmem [shape: f32[16,128], index: 0, kind: input, shape index: {}]
  %s1 = inlined_call_operand.vmem [shape: f32[128,128], index: 1, kind: input, shape index: {}]
  %s2 = inlined_call_operand.vmem [shape: f32[128,128], index: 2, kind: input, shape index: {}]
  %s3 = inlined_call_operand.vmem [shape: f32[1,128], index: 3, kind: input, shape index: {}]
  %s4 = inlined_call_operand.vmem [shape: f32[16,128], index: 4, kind: output, shape index: {}]
  %s5 = sld [smem:[#allocation0]]
  $region57: #{feed_forward_block.1} parent=0
    _
  %s7 = ssub.s32 1, %s5
  %s8 = scalar_select 0, %s7, %s5
  loop: start=0, step=1, limit=4
  $region2: #{feed_forward_block.1} parent=0 // loop_pre_header
    _
  $region3: #{feed_forward_block.1} parent=0 // loop_header
    %s10 = sphi 0, %s14
    %p11 = scmp.ge.s32.totalorder %s10, 4
    %s17 = sphi 0, %s36
    %s18 = sphi 0, %s32
    %s19 = sphi 0, %s28
    %s20 = sphi 0, %s17
    %s21 = sphi 0, %s18
    %s22 = sphi 0, %s19
    %s23 = sphi 0, %s20
    %s24 = sphi 0, %s21
    %s25 = sphi 0, %s22
    %s39 = sphi 0, %s41
    %s42 = sphi 0, %s39
    %s43 = sphi 0, %s42
    %s59 = sphi 0, %s43
    %s65 = sphi 0, %s67
    %s68 = sphi 0, %s65
    %s69 = sphi 0, %s68
    %s85 = sphi 0, %s69
    %s93 = sphi 0, %s95
    %s96 = sphi 0, %s93
    %s97 = sphi 0, %s96
    %s113 = sphi 0, %s97
    %s119 = sphi 0, %s121
    %s122 = sphi 0, %s119
    %s123 = sphi 0, %s122
    %s139 = sphi 0, %s123
    %s147 = sphi 0, %s149
    %s150 = sphi 0, %s147
    %s151 = sphi 0, %s150
    %s167 = sphi 0, %s151
  $region4: #{feed_forward_block.1} parent=0 // loop_header_branch
    %13 = sbr.rel (%p11) target = $region8
  $region5: #{feed_forward_block.1} parent=0 // loop_body
    %s15 = ssub.s32 %s10, 1
    %s16 = ssub.s32 %s10, 2
    %s26 = sadd.s32 1, %s19
    %p27 = scmp.ge.s32.totalorder %s26, 1
    %s28 = scalar_select %p27, 0, %s26
    %s29 = sadd.s32 1, %s18
    %s30 = scalar_select %p27, %s29, %s18
    %p31 = scmp.ge.s32.totalorder %s30, 1
    %s32 = scalar_select %p31, 0, %s30
    %s33 = sadd.s32 1, %s17
    %s34 = scalar_select %p31, %s33, %s17
    %p35 = scmp.ge.s32.totalorder %s34, 2
    %s36 = scalar_select %p35, 0, %s34
    %s37 = ssub.s32 %s17, %s36
    %p38 = scmp.eq.s32.totalorder %s37, 0
    %s40 = sadd.s32 %s39, 1
    %s41 = scalar_select %p38, %s39, %s40
    %p44 = pneg %p38
    %p45 = scmp.eq.s32.totalorder %s10, 1
    %p46 = por %p44, %p45
    %p47 = scmp.ne.s32.totalorder %s39, %s42
    %p48 = scmp.eq.s32.totalorder %s10, 0
    %p49 = por %p47, %p48
    %p50 = scmp.ne.s32.totalorder %s39, %s42
    %p51 = scmp.eq.s32.totalorder %s15, 1
    %p52 = por %p50, %p51
    %p53 = scmp.ne.s32.totalorder %s42, %s43
    %p54 = scmp.eq.s32.totalorder %s15, 0
    %p55 = por %p53, %p54
    %p56 = scmp.ne.s32.totalorder %s42, %s43
    %p57 = scmp.eq.s32.totalorder %s16, 1
    %p58 = por %p56, %p57
    %p60 = scmp.ne.s32.totalorder %s43, %s59
    %p61 = scmp.eq.s32.totalorder %s16, 0
    %p62 = por %p60, %p61
    %s63 = ssub.s32 %s19, %s28
    %p64 = scmp.eq.s32.totalorder %s63, 0
    %s66 = sadd.s32 %s65, 1
    %s67 = scalar_select %p64, %s65, %s66
    %p70 = pneg %p64
    %p71 = scmp.eq.s32.totalorder %s10, 1
    %p72 = por %p70, %p71
    %p73 = scmp.ne.s32.totalorder %s65, %s68
    %p74 = scmp.eq.s32.totalorder %s10, 0
    %p75 = por %p73, %p74
    %p76 = scmp.ne.s32.totalorder %s65, %s68
    %p77 = scmp.eq.s32.totalorder %s15, 1
    %p78 = por %p76, %p77
    %p79 = scmp.ne.s32.totalorder %s68, %s69
    %p80 = scmp.eq.s32.totalorder %s15, 0
    %p81 = por %p79, %p80
    %p82 = scmp.ne.s32.totalorder %s68, %s69
    %p83 = scmp.eq.s32.totalorder %s16, 1
    %p84 = por %p82, %p83
    %p86 = scmp.ne.s32.totalorder %s69, %s85
    %p87 = scmp.eq.s32.totalorder %s16, 0
    %p88 = por %p86, %p87
    %s89 = ssub.s32 %s19, %s28
    %s90 = ssub.s32 %s18, %s32
    %s91 = sor.u32 %s89, %s90
    %p92 = scmp.eq.s32.totalorder %s91, 0
    %s94 = sadd.s32 %s93, 1
    %s95 = scalar_select %p92, %s93, %s94
    %p98 = pneg %p92
    %p99 = scmp.eq.s32.totalorder %s10, 1
    %p100 = por %p98, %p99
    %p101 = scmp.ne.s32.totalorder %s93, %s96
    %p102 = scmp.eq.s32.totalorder %s10, 0
    %p103 = por %p101, %p102
    %p104 = scmp.ne.s32.totalorder %s93, %s96
    %p105 = scmp.eq.s32.totalorder %s15, 1
    %p106 = por %p104, %p105
    %p107 = scmp.ne.s32.totalorder %s96, %s97
    %p108 = scmp.eq.s32.totalorder %s15, 0
    %p109 = por %p107, %p108
    %p110 = scmp.ne.s32.totalorder %s96, %s97
    %p111 = scmp.eq.s32.totalorder %s16, 1
    %p112 = por %p110, %p111
    %p114 = scmp.ne.s32.totalorder %s97, %s113
    %p115 = scmp.eq.s32.totalorder %s16, 0
    %p116 = por %p114, %p115
    %s117 = ssub.s32 %s18, %s32
    %p118 = scmp.eq.s32.totalorder %s117, 0
    %s120 = sadd.s32 %s119, 1
    %s121 = scalar_select %p118, %s119, %s120
    %p124 = pneg %p118
    %p125 = scmp.eq.s32.totalorder %s10, 1
    %p126 = por %p124, %p125
    %p127 = scmp.ne.s32.totalorder %s119, %s122
    %p128 = scmp.eq.s32.totalorder %s10, 0
    %p129 = por %p127, %p128
    %p130 = scmp.ne.s32.totalorder %s119, %s122
    %p131 = scmp.eq.s32.totalorder %s15, 1
    %p132 = por %p130, %p131
    %p133 = scmp.ne.s32.totalorder %s122, %s123
    %p134 = scmp.eq.s32.totalorder %s15, 0
    %p135 = por %p133, %p134
    %p136 = scmp.ne.s32.totalorder %s122, %s123
    %p137 = scmp.eq.s32.totalorder %s16, 1
    %p138 = por %p136, %p137
    %p140 = scmp.ne.s32.totalorder %s123, %s139
    %p141 = scmp.eq.s32.totalorder %s16, 0
    %p142 = por %p140, %p141
    %s143 = ssub.s32 %s17, %s36
    %s144 = ssub.s32 %s18, %s32
    %s145 = sor.u32 %s143, %s144
    %p146 = scmp.eq.s32.totalorder %s145, 0
    %s148 = sadd.s32 %s147, 1
    %s149 = scalar_select %p146, %s147, %s148
    %p152 = pneg %p146
    %p153 = scmp.eq.s32.totalorder %s10, 1
    %p154 = por %p152, %p153
    %p155 = scmp.ne.s32.totalorder %s147, %s150
    %p156 = scmp.eq.s32.totalorder %s10, 0
    %p157 = por %p155, %p156
    %p158 = scmp.ne.s32.totalorder %s147, %s150
    %p159 = scmp.eq.s32.totalorder %s15, 1
    %p160 = por %p158, %p159
    %p161 = scmp.ne.s32.totalorder %s150, %s151
    %p162 = scmp.eq.s32.totalorder %s15, 0
    %p163 = por %p161, %p162
    %p164 = scmp.ne.s32.totalorder %s150, %s151
    %p165 = scmp.eq.s32.totalorder %s16, 1
    %p166 = por %p164, %p165
    %p168 = scmp.ne.s32.totalorder %s151, %s167
    %p169 = scmp.eq.s32.totalorder %s16, 0
    %p170 = por %p168, %p169
    %p171 = scmp.le.s32.totalorder 1, %s10
    %p172 = scmp.lt.s32.totalorder %s10, 3
    %p173 = pnand %p171, %p172
    %p174 = pneg %p173
    // Predicated region
    $region9: #{feed_forward_block.1} parent=5 // pred_check
      _
    $region10: #{feed_forward_block.1} parent=5 // pred_check_branch
      %176 = sbr.rel (%p173) target = $region12
    $region11: #{feed_forward_block.1} parent=5 // pred_region
      %s177 = ssub.s32 %s10, 1
      // Predicated region
      $region13: #{feed_forward_block.1} parent=11 // pred_check
        %p178 = pneg %p81
      $region14: #{feed_forward_block.1} parent=11 // pred_check_branch
        %180 = sbr.rel (%p178) target = $region16
      $region15: #{feed_forward_block.1} parent=11 // pred_region
        %p181 = scmp.lt.s32.totalorder %s22, 0
        %s182 = scalar_select %p181, %s22, 0
        %s183 = smul.addr %s182, 8
        %s184 = scalar_lea.vmem %s1, %s183
      $region16: #{feed_forward_block.1} parent=11 // pred_fallthru
        _
      // Predicated region
      $region17: #{feed_forward_block.1} parent=11 // pred_check
        %p185 = pneg %p109
      $region18: #{feed_forward_block.1} parent=11 // pred_check_branch
        %187 = sbr.rel (%p185) target = $region20
      $region19: #{feed_forward_block.1} parent=11 // pred_region
        %s188 = smul.u32 16, %s22
        %p189 = scmp.lt.s32.totalorder %s188, 15
        %s190 = scalar_select %p189, %s188, 15
        %p191 = scmp.lt.s32.totalorder %s21, 0
        %s192 = scalar_select %p191, %s21, 0
        %s193 = sadd.s32 %s192, %s190
        %s194 = smul.addr %s193, 8
        %s195 = scalar_lea.vmem %s2, %s194
        %s196 = smul.u32 16, %s22
      $region20: #{feed_forward_block.1} parent=11 // pred_fallthru
        _
      // Predicated region
      $region21: #{feed_forward_block.1} parent=11 // pred_check
        %p197 = pneg %p135
      $region22: #{feed_forward_block.1} parent=11 // pred_check_branch
        %199 = sbr.rel (%p197) target = $region24
      $region23: #{feed_forward_block.1} parent=11 // pred_region
        %p200 = scmp.lt.s32.totalorder %s21, 0
        %s201 = scalar_select %p200, %s21, 0
        %s202 = scalar_lea.vmem %s3, %s201
      $region24: #{feed_forward_block.1} parent=11 // pred_fallthru
        _
    $region12: #{feed_forward_block.1} parent=5 // pred_fallthru
      _
    %p203 = scmp.lt.s32.totalorder %s10, 2
    // Predicated region
    $region25: #{feed_forward_block.1} parent=5 // pred_check
      %p204 = pneg %p203
    $region26: #{feed_forward_block.1} parent=5 // pred_check_branch
      %206 = sbr.rel (%p204) target = $region28
    $region27: #{feed_forward_block.1} parent=5 // pred_region
      // Predicated region
      $region29: #{feed_forward_block.1} parent=27 // pred_check
        %p207 = pneg %p49
      $region30: #{feed_forward_block.1} parent=27 // pred_check_branch
        %209 = sbr.rel (%p207) target = $region32
      $region31: #{feed_forward_block.1} parent=27 // pred_region
        %p210 = scmp.lt.s32.totalorder %s17, 1
        %s211 = scalar_select %p210, %s17, 1
        %s212 = smul.addr %s211, 8
        %s213 = scalar_lea.vmem %s0, %s212
      $region32: #{feed_forward_block.1} parent=27 // pred_fallthru
        _
    $region28: #{feed_forward_block.1} parent=5 // pred_fallthru
      _
    %p214 = scmp.le.s32.totalorder 1, %s10
    %p215 = scmp.lt.s32.totalorder %s10, 3
    %p216 = pnand %p214, %p215
    %p217 = pneg %p216
    // Predicated region
    $region33: #{feed_forward_block.1} parent=5 // pred_check
      _
    $region34: #{feed_forward_block.1} parent=5 // pred_check_branch
      %219 = sbr.rel (%p216) target = $region36
    $region35: #{feed_forward_block.1} parent=5 // pred_region
      %s220 = ssub.s32 %s10, 1
      %p221 = scmp.lt.s32.totalorder %s20, 1
      %s222 = scalar_select %p221, %s20, 1
      %s223 = smul.addr %s222, 8
      %s224 = scalar_lea.vmem %s0, %s223
      %p225 = pneg %p55
      %p226 = pneg %p52
      %p227 = scmp.lt.s32.totalorder %s22, 0
      %s228 = scalar_select %p227, %s22, 0
      %s229 = smul.addr %s228, 8
      %s230 = scalar_lea.vmem %s1, %s229
      %p231 = pneg %p81
      %p232 = pneg %p78
      %s233 = smul.u32 16, %s22
      %p234 = scmp.lt.s32.totalorder %s233, 15
      %s235 = scalar_select %p234, %s233, 15
      %p236 = scmp.lt.s32.totalorder %s21, 0
      %s237 = scalar_select %p236, %s21, 0
      %s238 = sadd.s32 %s237, %s235
      %s239 = smul.addr %s238, 8
      %s240 = scalar_lea.vmem %s2, %s239
      %p241 = pneg %p109
      %p242 = pneg %p106
      %p243 = scmp.lt.s32.totalorder %s21, 0
      %s244 = scalar_select %p243, %s21, 0
      %s245 = scalar_lea.vmem %s3, %s244
      %p246 = pneg %p135
      %p247 = pneg %p132
      %p248 = pneg %p163
      %p249 = pneg %p160
      %p250 = scmp.lt.s32.totalorder %s20, 1
      %s251 = scalar_select %p250, %s20, 1
      %p252 = scmp.lt.s32.totalorder %s21, 0
      %s253 = scalar_select %p252, %s21, 0
      %s254 = sadd.s32 %s253, %s251
      %s255 = smul.addr %s254, 8
      %s256 = scalar_lea.vmem %s4, %s255
      %p257 = scmp.lt.s32.totalorder %s20, 1
      %s258 = scalar_select %p257, %s20, 1
      %s259 = smul.addr %s258, 8
      %s260 = scalar_lea.vmem %s0, %s259
      %p261 = scmp.lt.s32.totalorder %s22, 0
      %s262 = scalar_select %p261, %s22, 0
      %s263 = smul.addr %s262, 8
      %s264 = scalar_lea.vmem %s1, %s263
      %s265 = smul.u32 16, %s22
      %p266 = scmp.lt.s32.totalorder %s265, 15
      %s267 = scalar_select %p266, %s265, 15
      %p268 = scmp.lt.s32.totalorder %s21, 0
      %s269 = scalar_select %p268, %s21, 0
      %s270 = sadd.s32 %s269, %s267
      %s271 = smul.addr %s270, 8
      %s272 = scalar_lea.vmem %s2, %s271
      %s273 = smul.u32 16, %s22
      %p274 = scmp.lt.s32.totalorder %s21, 0
      %s275 = scalar_select %p274, %s21, 0
      %s276 = scalar_lea.vmem %s3, %s275
      %p277 = scmp.lt.s32.totalorder %s20, 1
      %s278 = scalar_select %p277, %s20, 1
      %p279 = scmp.lt.s32.totalorder %s21, 0
      %s280 = scalar_select %p279, %s21, 0
      %s281 = sadd.s32 %s280, %s278
      %s282 = smul.addr %s281, 8
      %s283 = scalar_lea.vmem %s4, %s282
      %p284 = scmp.eq.s32.totalorder %s22, 0
      // Predicated region
      $region37: #{feed_forward_block.1} parent=35 // pred_check
        %p285 = pneg %p284
      $region38: #{feed_forward_block.1} parent=35 // pred_check_branch
        %287 = sbr.rel (%p285) target = $region40
      $region39: #{feed_forward_block.1} parent=35 // pred_region
        %288 = vst [vmem:[#allocation2] sm:$0xff] 0.0
      $region40: #{feed_forward_block.1} parent=35 // pred_fallthru
        _
      %v289 = vld [vmem:[%s260] sm:$0xff]
      %v290 = vld [vmem:[%s264] sm:$0xff]
      %v291 = vld [vmem:[%s264 + $0x8] sm:$0xff]
      %v292 = vld [vmem:[%s264 + $0x10] sm:$0xff]
      %v293 = vld [vmem:[%s264 + $0x18] sm:$0xff]
      %v294 = vld [vmem:[%s264 + $0x20] sm:$0xff]
      %v295 = vld [vmem:[%s264 + $0x28] sm:$0xff]
      %v296 = vld [vmem:[%s264 + $0x30] sm:$0xff]
      %v297 = vld [vmem:[%s264 + $0x38] sm:$0xff]
      %v298 = vld [vmem:[%s264 + $0x40] sm:$0xff]
      %v299 = vld [vmem:[%s264 + $0x48] sm:$0xff]
      %v300 = vld [vmem:[%s264 + $0x50] sm:$0xff]
      %v301 = vld [vmem:[%s264 + $0x58] sm:$0xff]
      %v302 = vld [vmem:[%s264 + $0x60] sm:$0xff]
      %v303 = vld [vmem:[%s264 + $0x68] sm:$0xff]
      %v304 = vld [vmem:[%s264 + $0x70] sm:$0xff]
      %v305 = vld [vmem:[%s264 + $0x78] sm:$0xff]
      %306 = vmatpush.msra.mxu0 %v305
      %307 = vmatpush.msra.mxu0 %v304
      %308 = vmatpush.msra.mxu0 %v303
      %309 = vmatpush.msra.mxu0 %v302
      %310 = vmatpush.msra.mxu0 %v301
      %311 = vmatpush.msra.mxu0 %v300
      %312 = vmatpush.msra.mxu0 %v299
      %313 = vmatpush.msra.mxu0 %v298
      %314 = vmatpush.msra.mxu0 %v297
      %315 = vmatpush.msra.mxu0 %v296
      %316 = vmatpush.msra.mxu0 %v295
      %317 = vmatpush.msra.mxu0 %v294
      %318 = vmatpush.msra.mxu0 %v293
      %319 = vmatpush.msra.mxu0 %v292
      %320 = vmatpush.msra.mxu0 %v291
      %321 = vmatpush.msra.mxu0 %v290
      %322 = vmatmul.f32.gmra.mxu0 %v289
      %v323 = vpop.f32.mrf.mxu0
      %v324 = vadd.f32 0.0, %v323
      %325 = vdwg.mxu0
      %v326 = vld [vmem:[#allocation2] sm:$0xff]
      %v327 = vld [vmem:[%s272] sm:$0xff]
      %v328 = vld [vmem:[%s272 + $0x8] sm:$0xff]
      %v329 = vld [vmem:[%s272 + $0x10] sm:$0xff]
      %v330 = vld [vmem:[%s272 + $0x18] sm:$0xff]
      %v331 = vld [vmem:[%s272 + $0x20] sm:$0xff]
      %v332 = vld [vmem:[%s272 + $0x28] sm:$0xff]
      %v333 = vld [vmem:[%s272 + $0x30] sm:$0xff]
      %v334 = vld [vmem:[%s272 + $0x38] sm:$0xff]
      %v335 = vld [vmem:[%s272 + $0x40] sm:$0xff]
      %v336 = vld [vmem:[%s272 + $0x48] sm:$0xff]
      %v337 = vld [vmem:[%s272 + $0x50] sm:$0xff]
      %v338 = vld [vmem:[%s272 + $0x58] sm:$0xff]
      %v339 = vld [vmem:[%s272 + $0x60] sm:$0xff]
      %v340 = vld [vmem:[%s272 + $0x68] sm:$0xff]
      %v341 = vld [vmem:[%s272 + $0x70] sm:$0xff]
      %v342 = vld [vmem:[%s272 + $0x78] sm:$0xff]
      %343 = vmatpush.msra.mxu0 %v342
      %344 = vmatpush.msra.mxu0 %v341
      %345 = vmatpush.msra.mxu0 %v340
      %346 = vmatpush.msra.mxu0 %v339
      %347 = vmatpush.msra.mxu0 %v338
      %348 = vmatpush.msra.mxu0 %v337
      %349 = vmatpush.msra.mxu0 %v336
      %350 = vmatpush.msra.mxu0 %v335
      %351 = vmatpush.msra.mxu0 %v334
      %352 = vmatpush.msra.mxu0 %v333
      %353 = vmatpush.msra.mxu0 %v332
      %354 = vmatpush.msra.mxu0 %v331
      %355 = vmatpush.msra.mxu0 %v330
      %356 = vmatpush.msra.mxu0 %v329
      %357 = vmatpush.msra.mxu0 %v328
      %358 = vmatpush.msra.mxu0 %v327
      %359 = vmatmul.f32.gmra.mxu0 %v324
      %v360 = vpop.f32.mrf.mxu0
      %v361 = vadd.f32 0.0, %v360
      %362 = vdwg.mxu0
      %v363 = vadd.f32 %v326, %v361
      %364 = vst [vmem:[#allocation2] sm:$0xff] %v363
      // Predicated region
      $region41: #{feed_forward_block.1} parent=35 // pred_check
        %p365 = pneg %p284
      $region42: #{feed_forward_block.1} parent=35 // pred_check_branch
        %367 = sbr.rel (%p365) target = $region44
      $region43: #{feed_forward_block.1} parent=35 // pred_region
        %v368 = vld [vmem:[#allocation2] sm:$0xff]
        %v369 = vld [vmem:[%s276] sm:$0x1]
        %v371 = vperm.slane %v369, 0
        %v373 = vadd.f32 %v368, %v371
        %374 = vst [vmem:[%s283] sm:$0xff] %v373
      $region44: #{feed_forward_block.1} parent=35 // pred_fallthru
        _
      %p375 = scmp.lt.s32.totalorder %s20, 1
      %s376 = scalar_select %p375, %s20, 1
      %p377 = scmp.lt.s32.totalorder %s21, 0
      %s378 = scalar_select %p377, %s21, 0
      %s379 = sadd.s32 %s378, %s376
      %s380 = smul.addr %s379, 8
      %s381 = scalar_lea.vmem %s4, %s380
      // Predicated region
      $region45: #{feed_forward_block.1} parent=35 // pred_check
        %p382 = pneg %p160
      $region46: #{feed_forward_block.1} parent=35 // pred_check_branch
        %384 = sbr.rel (%p382) target = $region48
      $region47: #{feed_forward_block.1} parent=35 // pred_region
        _
      $region48: #{feed_forward_block.1} parent=35 // pred_fallthru
        _
    $region36: #{feed_forward_block.1} parent=5 // pred_fallthru
      _
    %p385 = scmp.le.s32.totalorder 2, %s10
    // Predicated region
    $region49: #{feed_forward_block.1} parent=5 // pred_check
      %p386 = pneg %p385
    $region50: #{feed_forward_block.1} parent=5 // pred_check_branch
      %388 = sbr.rel (%p386) target = $region52
    $region51: #{feed_forward_block.1} parent=5 // pred_region
      %s389 = ssub.s32 %s10, 2
      // Predicated region
      $region53: #{feed_forward_block.1} parent=51 // pred_check
        %p390 = pneg %p166
      $region54: #{feed_forward_block.1} parent=51 // pred_check_branch
        %392 = sbr.rel (%p390) target = $region56
      $region55: #{feed_forward_block.1} parent=51 // pred_region
        %p393 = scmp.lt.s32.totalorder %s23, 1
        %s394 = scalar_select %p393, %s23, 1
        %p395 = scmp.lt.s32.totalorder %s24, 0
        %s396 = scalar_select %p395, %s24, 0
        %s397 = sadd.s32 %s396, %s394
        %s398 = smul.addr %s397, 8
        %s399 = scalar_lea.vmem %s4, %s398
      $region56: #{feed_forward_block.1} parent=51 // pred_fallthru
        _
    $region52: #{feed_forward_block.1} parent=5 // pred_fallthru
      _
  $region6: #{feed_forward_block.1} parent=0 // loop_footer
    %s14 = sadd.s32 1, %s10
  $region7: #{feed_forward_block.1} parent=0 // loop_footer_branch
    %9 = sbr.rel target = $region3
  $region8: #{feed_forward_block.1} parent=0 // loop_exit
    _

</llo_original>
